<compile_context>
chip_gen: v7x
topology: tpu7x:2x2x1
jax: 0.10.0
libtpu: 0.0.40
codegen_flags: <defaults>
</compile_context>

<pallas_src>
import functools

import numpy as np
import jax
import jax.numpy as jnp
from jax.experimental import pallas as pl
from jax.experimental.pallas import tpu as pltpu


def _round_up(x, m):
    return ((x + m - 1) // m) * m


def _conv_kernel(x_ref, w_ref, o_ref, xcol_ref, *, TB, C_in, K, Wp, N, Nt):
    """One batch tile of conv2d as a single fused MXU matmul.

    x_ref    : (TB, C_in, L)      flat padded images (bf16), lane-dense
    w_ref    : (C_out, F + 2)     im2col weights ++ [bias, 0] columns (bf16)
    o_ref    : (TB, C_out, N)     dense stride-1 output (f32), lane-dense
    xcol_ref : (F + 2, TB*Nt)     im2col scratch (bf16), Nt = round_up(N,128)
    """
    KK = K * K
    F = C_in * KK

    # Folded bias: the last two rows of the slab are all ones
    # (weight columns are [bias, 0]); written every step -> megacore safe.
    xcol_ref[F:F + 2, :] = jnp.ones((2, TB * Nt), dtype=xcol_ref.dtype)

    # Build the im2col slab from contiguous lane slices of the flat padded
    # image: window (kh, kw) == flat vector shifted by kh*Wp + kw.
    for b in range(TB):
        base = b * Nt                     # 128-aligned lane offset per image
        for k in range(KK):
            kh, kw = divmod(k, K)
            off = kh * Wp + kw            # static shift
            xcol_ref[k * C_in:(k + 1) * C_in, base:base + N] = (
                x_ref[b, :, off:off + N])

    # Single MXU matmul per grid step; f32 accumulation inside the MXU.
    res = jnp.dot(w_ref[...], xcol_ref[...],
                  preferred_element_type=jnp.float32)      # (C_out, TB*Nt)

    for b in range(TB):
        o_ref[b, :, :] = res[:, b * Nt:b * Nt + N].astype(o_ref.dtype)


def generic_conv_forward(x_flat, weight, bias, *, input_shape, in_channels,
                         out_channels, kernel_size, padding=0, stride=1,
                         compute_dtype=jnp.bfloat16, batch_tile=None):
    """Pallas forward of GenericConvNode: (B, C_in*H*W) -> (B, C_out*OH*OW)."""
    B = x_flat.shape[0]
    H, W = input_shape
    C_in, C_out, K = in_channels, out_channels, kernel_size
    assert x_flat.shape[1] == C_in * H * W

    OH = (H + 2 * padding - K) // stride + 1
    OW = (W + 2 * padding - K) // stride + 1
    Hp, Wp = H + 2 * padding, W + 2 * padding
    OH1 = Hp - K + 1                  # stride-1 (dense) output height
    N = OH1 * Wp                      # dense output columns per image
    Nt = _round_up(N, 128)            # 128-aligned per-image slab segment
    L = _round_up(Hp * Wp + (K - 1), 128)   # flat padded image + zero tail
    F = C_in * K * K
    F_pad = F + 2                     # + [bias, 0] columns / ones rows

    # ---- XLA-side layout plumbing (no FLOPs) ----
    x_img = x_flat.reshape(B, C_in, H, W)
    x_pad = jnp.pad(x_img,
                    ((0, 0), (0, 0), (padding, padding), (padding, padding)))
    x_lin = x_pad.reshape(B, C_in, Hp * Wp)
    x_lin = jnp.pad(x_lin, ((0, 0), (0, 0), (0, L - Hp * Wp)))
    x_lin = x_lin.astype(compute_dtype)

    # Weights: (C_out, C_in, K, K) -> columns ordered (kh, kw, c) to match the
    # slab row order; append [bias, 0] columns for the folded bias.
    w_col = jnp.transpose(weight, (0, 2, 3, 1)).reshape(C_out, F)
    w_aug = jnp.concatenate(
        [w_col, bias.reshape(C_out, 1), jnp.zeros((C_out, 1), w_col.dtype)],
        axis=1).astype(compute_dtype)

    # ---- batch tile: VMEM budget + >=2 grid steps (megacore) ----
    cb = jnp.dtype(compute_dtype).itemsize
    per_tb_bytes = (2 * C_in * L * cb          # double-buffered x block
                    + 2 * C_out * N * 4        # double-buffered f32 out block
                    + F_pad * Nt * cb)         # im2col scratch
    vmem_budget = 12 * 1024 * 1024             # fits v7x (64 MiB) with margin
    tb_fit = max(1, vmem_budget // per_tb_bytes)
    if batch_tile is not None:
        TB = batch_tile
    else:
        TB = max(1, min(tb_fit, max(1, B // 2), 8))
    grid = (pl.cdiv(B, TB),)

    kernel = functools.partial(_conv_kernel, TB=TB, C_in=C_in, K=K, Wp=Wp,
                               N=N, Nt=Nt)

    flops = 2 * B * C_out * F_pad * Nt
    bytes_accessed = (B * C_in * L + C_out * F_pad) * cb + B * C_out * N * 4

    out_full = pl.pallas_call(
        kernel,
        out_shape=jax.ShapeDtypeStruct((B, C_out, N), jnp.float32),
        grid_spec=pltpu.PrefetchScalarGridSpec(
            num_scalar_prefetch=0,
            grid=grid,
            in_specs=[
                pl.BlockSpec((TB, C_in, L), lambda i: (i, 0, 0)),
                pl.BlockSpec((C_out, F_pad), lambda i: (0, 0)),
            ],
            out_specs=pl.BlockSpec((TB, C_out, N), lambda i: (i, 0, 0)),
            scratch_shapes=[pltpu.VMEM((F_pad, TB * Nt), compute_dtype)],
        ),
        compiler_params=pltpu.CompilerParams(
            dimension_semantics=("parallel",),
            vmem_limit_bytes=32 * 1024 * 1024,
        ),
        cost_estimate=pl.CostEstimate(flops=flops, transcendentals=0,
                                      bytes_accessed=bytes_accessed),
    )(x_lin, w_aug)

    # Dense stride-1 result -> valid (stride-s) outputs, PyTorch NCHW order.
    out = out_full.reshape(B, C_out, OH1, Wp)
    out = out[:, :, ::stride, ::stride][:, :, :OH, :OW]
    return out.reshape(B, C_out * OH * OW)


def generic_conv_forward_ref(x_flat, weight, bias, *, input_shape, in_channels,
                             kernel_size, padding=0, stride=1):
    """Pure-JAX reference mirroring F.conv2d + view(B, -1)."""
    B = x_flat.shape[0]
    H, W = input_shape
    x_img = x_flat.reshape(B, in_channels, H, W)
    out = jax.lax.conv_general_dilated(
        x_img, weight,
        window_strides=(stride, stride),
        padding=[(padding, padding), (padding, padding)],
        dimension_numbers=('NCHW', 'OIHW', 'NCHW'))
    out = out + bias[None, :, None, None]
    return out.reshape(B, -1)


if __name__ == "__main__":
    # Small shapes consistent with the module.
    B = 2
    H, W = 16, 16
    C_in, C_out = 4, 8
    K = 3
    padding, stride = 1, 1
    input_dim = C_in * H * W

    key = jax.random.PRNGKey(0)
    k_x, k_w, k_b = jax.random.split(key, 3)
    x_flat = jax.random.normal(k_x, (B, input_dim), dtype=jnp.float32)
    weight = jax.random.normal(k_w, (C_out, C_in, K, K), dtype=jnp.float32) * 0.1
    bias = jax.random.normal(k_b, (C_out,), dtype=jnp.float32)

    out = generic_conv_forward(x_flat, weight, bias, input_shape=(H, W),
                               in_channels=C_in, out_channels=C_out,
                               kernel_size=K, padding=padding, stride=stride)
    out = jax.block_until_ready(out)

    ref = generic_conv_forward_ref(x_flat, weight, bias, input_shape=(H, W),
                                   in_channels=C_in, kernel_size=K,
                                   padding=padding, stride=stride)
    ref = jax.block_until_ready(ref)

    OH = (H + 2 * padding - K) // stride + 1
    OW = (W + 2 * padding - K) // stride + 1
    assert out.shape == (B, C_out * OH * OW)
    # bf16 MXU inputs with f32 accumulation -> loose-ish tolerance vs f32 ref.
    np.testing.assert_allclose(np.asarray(out), np.asarray(ref),
                               rtol=5e-2, atol=5e-2)
    print("KERNEL_OK")
</pallas_src>

<mosaic_0001>
module attributes {stable_mosaic.version = 11 : i64} {
  func.func @_conv_kernel(%arg0: i32, %arg1: memref<1x4x384xbf16, #tpu.memory_space<vmem>>, %arg2: memref<8x38xbf16, #tpu.memory_space<vmem>>, %arg3: memref<1x8x288xf32, #tpu.memory_space<vmem>>, %arg4: memref<38x384xbf16, #tpu.memory_space<vmem>>) attributes {dimension_semantics = [#tpu.dimension_semantics<parallel>], iteration_bounds = array<i64: 2>, scalar_prefetch = 0 : i64, scratch_operands = 1 : i64, tpu.core_type = #tpu.core_type<tc>, window_params = [{transform_indices = @transform_0, window_bounds = array<i64: 1, 4, 384>}, {pipeline_mode = #tpu.pipeline_mode<synchronous>, transform_indices = @transform_1, window_bounds = array<i64: 8, 38>}, {transform_indices = @transform_2, window_bounds = array<i64: 1, 8, 288>}]} {
    %cst = arith.constant 1.000000e+00 : bf16
    %0 = vector.broadcast %cst : bf16 to vector<2x384xbf16>
    %c36 = arith.constant 36 : index
    %c0 = arith.constant 0 : index
    %1 = vector.load %arg4[%c36, %c0] : memref<38x384xbf16, #tpu.memory_space<vmem>>, vector<2x384xbf16>
    tpu.vector_store %arg4[%c36, %c0], %0 {strides = array<i32>} : memref<38x384xbf16, #tpu.memory_space<vmem>>, vector<2x384xbf16>,
    %c0_0 = arith.constant 0 : index
    %c0_1 = arith.constant 0 : index
    %c0_2 = arith.constant 0 : index
    %2 = vector.load %arg1[%c0_0, %c0_1, %c0_2] : memref<1x4x384xbf16, #tpu.memory_space<vmem>>, vector<1x4x288xbf16>
    %3 = vector.shape_cast %2 : vector<1x4x288xbf16> to vector<4x288xbf16>
    %c0_3 = arith.constant 0 : index
    %c0_4 = arith.constant 0 : index
    %4 = vector.load %arg4[%c0_3, %c0_4] : memref<38x384xbf16, #tpu.memory_space<vmem>>, vector<4x288xbf16>
    tpu.vector_store %arg4[%c0_3, %c0_4], %3 {strides = array<i32>} : memref<38x384xbf16, #tpu.memory_space<vmem>>, vector<4x288xbf16>,
    %c0_5 = arith.constant 0 : index
    %c0_6 = arith.constant 0 : index
    %c1 = arith.constant 1 : index
    %5 = vector.load %arg1[%c0_5, %c0_6, %c1] : memref<1x4x384xbf16, #tpu.memory_space<vmem>>, vector<1x4x288xbf16>
    %6 = vector.shape_cast %5 : vector<1x4x288xbf16> to vector<4x288xbf16>
    %c4 = arith.constant 4 : index
    %c0_7 = arith.constant 0 : index
    %7 = vector.load %arg4[%c4, %c0_7] : memref<38x384xbf16, #tpu.memory_space<vmem>>, vector<4x288xbf16>
    tpu.vector_store %arg4[%c4, %c0_7], %6 {strides = array<i32>} : memref<38x384xbf16, #tpu.memory_space<vmem>>, vector<4x288xbf16>,
    %c0_8 = arith.constant 0 : index
    %c0_9 = arith.constant 0 : index
    %c2 = arith.constant 2 : index
    %8 = vector.load %arg1[%c0_8, %c0_9, %c2] : memref<1x4x384xbf16, #tpu.memory_space<vmem>>, vector<1x4x288xbf16>
    %9 = vector.shape_cast %8 : vector<1x4x288xbf16> to vector<4x288xbf16>
    %c8 = arith.constant 8 : index
    %c0_10 = arith.constant 0 : index
    %10 = vector.load %arg4[%c8, %c0_10] : memref<38x384xbf16, #tpu.memory_space<vmem>>, vector<4x288xbf16>
    tpu.vector_store %arg4[%c8, %c0_10], %9 {strides = array<i32>} : memref<38x384xbf16, #tpu.memory_space<vmem>>, vector<4x288xbf16>,
    %c0_11 = arith.constant 0 : index
    %c0_12 = arith.constant 0 : index
    %c18 = arith.constant 18 : index
    %11 = vector.load %arg1[%c0_11, %c0_12, %c18] : memref<1x4x384xbf16, #tpu.memory_space<vmem>>, vector<1x4x288xbf16>
    %12 = vector.shape_cast %11 : vector<1x4x288xbf16> to vector<4x288xbf16>
    %c12 = arith.constant 12 : index
    %c0_13 = arith.constant 0 : index
    %13 = vector.load %arg4[%c12, %c0_13] : memref<38x384xbf16, #tpu.memory_space<vmem>>, vector<4x288xbf16>
    tpu.vector_store %arg4[%c12, %c0_13], %12 {strides = array<i32>} : memref<38x384xbf16, #tpu.memory_space<vmem>>, vector<4x288xbf16>,
    %c0_14 = arith.constant 0 : index
    %c0_15 = arith.constant 0 : index
    %c19 = arith.constant 19 : index
    %14 = vector.load %arg1[%c0_14, %c0_15, %c19] : memref<1x4x384xbf16, #tpu.memory_space<vmem>>, vector<1x4x288xbf16>
    %15 = vector.shape_cast %14 : vector<1x4x288xbf16> to vector<4x288xbf16>
    %c16 = arith.constant 16 : index
    %c0_16 = arith.constant 0 : index
    %16 = vector.load %arg4[%c16, %c0_16] : memref<38x384xbf16, #tpu.memory_space<vmem>>, vector<4x288xbf16>
    tpu.vector_store %arg4[%c16, %c0_16], %15 {strides = array<i32>} : memref<38x384xbf16, #tpu.memory_space<vmem>>, vector<4x288xbf16>,
    %c0_17 = arith.constant 0 : index
    %c0_18 = arith.constant 0 : index
    %c20 = arith.constant 20 : index
    %17 = vector.load %arg1[%c0_17, %c0_18, %c20] : memref<1x4x384xbf16, #tpu.memory_space<vmem>>, vector<1x4x288xbf16>
    %18 = vector.shape_cast %17 : vector<1x4x288xbf16> to vector<4x288xbf16>
    %c20_19 = arith.constant 20 : index
    %c0_20 = arith.constant 0 : index
    %19 = vector.load %arg4[%c20_19, %c0_20] : memref<38x384xbf16, #tpu.memory_space<vmem>>, vector<4x288xbf16>
    tpu.vector_store %arg4[%c20_19, %c0_20], %18 {strides = array<i32>} : memref<38x384xbf16, #tpu.memory_space<vmem>>, vector<4x288xbf16>,
    %c0_21 = arith.constant 0 : index
    %c0_22 = arith.constant 0 : index
    %c36_23 = arith.constant 36 : index
    %20 = vector.load %arg1[%c0_21, %c0_22, %c36_23] : memref<1x4x384xbf16, #tpu.memory_space<vmem>>, vector<1x4x288xbf16>
    %21 = vector.shape_cast %20 : vector<1x4x288xbf16> to vector<4x288xbf16>
    %c24 = arith.constant 24 : index
    %c0_24 = arith.constant 0 : index
    %22 = vector.load %arg4[%c24, %c0_24] : memref<38x384xbf16, #tpu.memory_space<vmem>>, vector<4x288xbf16>
    tpu.vector_store %arg4[%c24, %c0_24], %21 {strides = array<i32>} : memref<38x384xbf16, #tpu.memory_space<vmem>>, vector<4x288xbf16>,
    %c0_25 = arith.constant 0 : index
    %c0_26 = arith.constant 0 : index
    %c37 = arith.constant 37 : index
    %23 = vector.load %arg1[%c0_25, %c0_26, %c37] : memref<1x4x384xbf16, #tpu.memory_space<vmem>>, vector<1x4x288xbf16>
    %24 = vector.shape_cast %23 : vector<1x4x288xbf16> to vector<4x288xbf16>
    %c28 = arith.constant 28 : index
    %c0_27 = arith.constant 0 : index
    %25 = vector.load %arg4[%c28, %c0_27] : memref<38x384xbf16, #tpu.memory_space<vmem>>, vector<4x288xbf16>
    tpu.vector_store %arg4[%c28, %c0_27], %24 {strides = array<i32>} : memref<38x384xbf16, #tpu.memory_space<vmem>>, vector<4x288xbf16>,
    %c0_28 = arith.constant 0 : index
    %c0_29 = arith.constant 0 : index
    %c38 = arith.constant 38 : index
    %26 = vector.load %arg1[%c0_28, %c0_29, %c38] : memref<1x4x384xbf16, #tpu.memory_space<vmem>>, vector<1x4x288xbf16>
    %27 = vector.shape_cast %26 : vector<1x4x288xbf16> to vector<4x288xbf16>
    %c32 = arith.constant 32 : index
    %c0_30 = arith.constant 0 : index
    %28 = vector.load %arg4[%c32, %c0_30] : memref<38x384xbf16, #tpu.memory_space<vmem>>, vector<4x288xbf16>
    tpu.vector_store %arg4[%c32, %c0_30], %27 {strides = array<i32>} : memref<38x384xbf16, #tpu.memory_space<vmem>>, vector<4x288xbf16>,
    %c0_31 = arith.constant 0 : index
    %c0_32 = arith.constant 0 : index
    %29 = vector.load %arg2[%c0_31, %c0_32] : memref<8x38xbf16, #tpu.memory_space<vmem>>, vector<8x38xbf16>
    %c0_33 = arith.constant 0 : index
    %c0_34 = arith.constant 0 : index
    %30 = vector.load %arg4[%c0_33, %c0_34] : memref<38x384xbf16, #tpu.memory_space<vmem>>, vector<38x384xbf16>
    %cst_35 = arith.constant dense<0.000000e+00> : vector<8x384xf32>
    %31 = tpu.matmul %29, %30, %cst_35 {dimension_numbers = #tpu.dot_dimension_numbers<[1], [0], [0], [1], [0, 0, 1, 1], [], []>} : vector<8x38xbf16>, vector<38x384xbf16>, vector<8x384xf32> -> vector<8x384xf32>
    %32 = vector.extract_strided_slice %31 {offsets = [0, 0], sizes = [8, 288], strides = [1, 1]} : vector<8x384xf32> to vector<8x288xf32>
    %c0_36 = arith.constant 0 : index
    %c0_37 = arith.constant 0 : index
    %c0_38 = arith.constant 0 : index
    %33 = vector.load %arg3[%c0_36, %c0_37, %c0_38] : memref<1x8x288xf32, #tpu.memory_space<vmem>>, vector<1x8x288xf32>
    %34 = vector.shape_cast %33 : vector<1x8x288xf32> to vector<8x288xf32>
    %35 = vector.shape_cast %32 : vector<8x288xf32> to vector<1x8x288xf32>
    tpu.vector_store %arg3[%c0_36, %c0_37, %c0_38], %35 {strides = array<i32>} : memref<1x8x288xf32, #tpu.memory_space<vmem>>, vector<1x8x288xf32>,
    return
  }
  func.func @transform_0(%arg0: i32) -> (i32, i32, i32) {
    %c0_i32 = arith.constant 0 : i32
    %c0_i32_0 = arith.constant 0 : i32
    %c0_i32_1 = arith.constant 0 : i32
    return %arg0, %c0_i32, %c0_i32_0 : i32, i32, i32
  }
  func.func @transform_1(%arg0: i32) -> (i32, i32) {
    %c0_i32 = arith.constant 0 : i32
    %c0_i32_0 = arith.constant 0 : i32
    %c0_i32_1 = arith.constant 0 : i32
    return %c0_i32, %c0_i32_0 : i32, i32
  }
  func.func @transform_2(%arg0: i32) -> (i32, i32, i32) {
    %c0_i32 = arith.constant 0 : i32
    %c0_i32_0 = arith.constant 0 : i32
    %c0_i32_1 = arith.constant 0 : i32
    return %arg0, %c0_i32, %c0_i32_0 : i32, i32, i32
  }
}

</mosaic_0001>

<llo_original>
// kernel: tpu_custom_call.1
$region0: #{tpu_custom_call.1}
  #allocation0 [shape = 'u32[]', space=smem, size = 0x4, offset = 0x4, fixed_abs, tag = 'smem constant byte address 0x4 - core index']
  #allocation1 [shape = 'u32[144,128]{1,0:T(1,128)}', space=vmem, size = 0x12000, scoped, tag = 'internal scratch']
  #allocation2 [shape = 'bf16[38,384]{1,0:T(8,128)(2,1)}', space=vmem, size = 0x7800, scoped, tag = 'scratch operand']
  %s0 = inlined_call_operand.hbm [shape: bf16[2,4,384], index: 0, kind: input, shape index: {}]
  %s1 = inlined_call_operand.hbm [shape: bf16[8,38], index: 1, kind: input, shape index: {}]
  %s2 = inlined_call_operand.hbm [shape: f32[2,8,288], index: 2, kind: output, shape index: {}]
  %s3 = sld [smem:[#allocation0]]
  $region49: #{tpu_custom_call.1} parent=0
    _
  %s5 = ssub.s32 1, %s3
  %s6 = scalar_select 0, %s5, %s3
  $region1: #{tpu_custom_call.1} parent=0
    #allocation3 [shape = 'u8[6144]{0}', space=vmem, size = 0x1800, scoped, tag = 'input window, operand 0']
    #allocation4 [shape = 's32[2]{0}', space=sflag, size = 0x8, scoped, tag = 'scoped memory for tpu_custom_call.1']
    #allocation5 [shape = 's32[2]{0}', space=sflag, size = 0x8, scoped, tag = 'scoped memory for tpu_custom_call.1']
    #allocation6 [shape = 'u8[2048]{0}', space=vmem, size = 0x800, scoped, tag = 'input window, operand 1, single buffered']
    #allocation7 [shape = 's32[1]{0}', space=sflag, size = 0x4, scoped, tag = 'scoped memory for tpu_custom_call.1']
    #allocation8 [shape = 'u8[24576]{0}', space=vmem, size = 0x6000, scoped, tag = 'output window, operand 0']
    %7 = vsyncpa [#allocation4], 0
    %s8 = scalar_lea.sflag [#allocation4], 1
    %9 = vsyncpa %s8, 0
    %10 = vsyncpa [#allocation7], 0
    %11 = vsyncpa [#allocation5], 0
    %s12 = scalar_lea.sflag [#allocation5], 1
    %13 = vsyncpa %s12, 0
    loop: start=0, step=1, limit=4
    $region2: #{tpu_custom_call.1} parent=1 // loop_pre_header
      _
    $region3: #{tpu_custom_call.1} parent=1 // loop_header
      %s15 = sphi 0, %s19
      %p16 = scmp.ge.s32.totalorder %s15, 4
      %s25 = sphi 0, %s27
      %s28 = sphi 0, %s25
      %s29 = sphi 0, %s28
      %s45 = sphi 0, %s29
      %s49 = sphi 0, %s49
      %s51 = sphi 0, %s49
      %s52 = sphi 0, %s51
      %s66 = sphi 0, %s52
      %s72 = sphi 0, %s74
      %s75 = sphi 0, %s72
      %s76 = sphi 0, %s75
      %s92 = sphi 0, %s76
    $region4: #{tpu_custom_call.1} parent=1 // loop_header_branch
      %18 = sbr.rel (%p16) target = $region8
    $region5: #{tpu_custom_call.1} parent=1 // loop_body
      %s20 = ssub.s32 %s15, 1
      %s21 = ssub.s32 %s15, 2
      %s22 = sadd.s32 %s15, 1
      %s23 = ssub.s32 %s15, %s22
      %p24 = scmp.eq.s32.totalorder %s23, 0
      %s26 = sadd.s32 %s25, 1
      %s27 = scalar_select %p24, %s25, %s26
      %p30 = pneg %p24
      %p31 = scmp.eq.s32.totalorder %s15, 1
      %p32 = por %p30, %p31
      %p33 = scmp.ne.s32.totalorder %s25, %s28
      %p34 = scmp.eq.s32.totalorder %s15, 0
      %p35 = por %p33, %p34
      %p36 = scmp.ne.s32.totalorder %s25, %s28
      %p37 = scmp.eq.s32.totalorder %s20, 1
      %p38 = por %p36, %p37
      %p39 = scmp.ne.s32.totalorder %s28, %s29
      %p40 = scmp.eq.s32.totalorder %s20, 0
      %p41 = por %p39, %p40
      %p42 = scmp.ne.s32.totalorder %s28, %s29
      %p43 = scmp.eq.s32.totalorder %s21, 1
      %p44 = por %p42, %p43
      %p46 = scmp.ne.s32.totalorder %s29, %s45
      %p47 = scmp.eq.s32.totalorder %s21, 0
      %p48 = por %p46, %p47
      %s50 = sadd.s32 %s49, 1
      %p53 = scmp.eq.s32.totalorder %s15, 1
      %p54 = scmp.ne.s32.totalorder %s49, %s51
      %p55 = scmp.eq.s32.totalorder %s15, 0
      %p56 = por %p54, %p55
      %p57 = scmp.ne.s32.totalorder %s49, %s51
      %p58 = scmp.eq.s32.totalorder %s20, 1
      %p59 = por %p57, %p58
      %p60 = scmp.ne.s32.totalorder %s51, %s52
      %p61 = scmp.eq.s32.totalorder %s20, 0
      %p62 = por %p60, %p61
      %p63 = scmp.ne.s32.totalorder %s51, %s52
      %p64 = scmp.eq.s32.totalorder %s21, 1
      %p65 = por %p63, %p64
      %p67 = scmp.ne.s32.totalorder %s52, %s66
      %p68 = scmp.eq.s32.totalorder %s21, 0
      %p69 = por %p67, %p68
      %s70 = ssub.s32 %s15, %s22
      %p71 = scmp.eq.s32.totalorder %s70, 0
      %s73 = sadd.s32 %s72, 1
      %s74 = scalar_select %p71, %s72, %s73
      %p77 = pneg %p71
      %p78 = scmp.eq.s32.totalorder %s15, 1
      %p79 = por %p77, %p78
      %p80 = scmp.ne.s32.totalorder %s72, %s75
      %p81 = scmp.eq.s32.totalorder %s15, 0
      %p82 = por %p80, %p81
      %p83 = scmp.ne.s32.totalorder %s72, %s75
      %p84 = scmp.eq.s32.totalorder %s20, 1
      %p85 = por %p83, %p84
      %p86 = scmp.ne.s32.totalorder %s75, %s76
      %p87 = scmp.eq.s32.totalorder %s20, 0
      %p88 = por %p86, %p87
      %p89 = scmp.ne.s32.totalorder %s75, %s76
      %p90 = scmp.eq.s32.totalorder %s21, 1
      %p91 = por %p89, %p90
      %p93 = scmp.ne.s32.totalorder %s76, %s92
      %p94 = scmp.eq.s32.totalorder %s21, 0
      %p95 = por %p93, %p94
      %p96 = scmp.le.s32.totalorder 1, %s15
      %p97 = scmp.lt.s32.totalorder %s15, 3
      %p98 = pnand %p96, %p97
      %p99 = pneg %p98
      // Predicated region
      $region9: #{tpu_custom_call.1} parent=5 // pred_check
        _
      $region10: #{tpu_custom_call.1} parent=5 // pred_check_branch
        %101 = sbr.rel (%p98) target = $region12
      $region11: #{tpu_custom_call.1} parent=5 // pred_region
        %s102 = ssub.s32 %s15, 1
        // Predicated region
        $region13: #{tpu_custom_call.1} parent=11 // pred_check
          %p103 = pneg %p62
        $region14: #{tpu_custom_call.1} parent=11 // pred_check_branch
          %105 = sbr.rel (%p103) target = $region16
        $region15: #{tpu_custom_call.1} parent=11 // pred_region
          %s107 = ssub.s32 64, 64
          %108 = vsyncadd [#allocation7], %s107
          %s110 = sshll.u32 [#allocation6], 4
          %s111 = int_to_ptr.vmem [resolvable:$true] %s110
          %113 = dma.hbm_to_vmem [thread:$0]  %s1, 64, %s111, [#allocation7]
        $region16: #{tpu_custom_call.1} parent=11 // pred_fallthru
          _
      $region12: #{tpu_custom_call.1} parent=5 // pred_fallthru
        _
      %p114 = scmp.lt.s32.totalorder %s15, 2
      // Predicated region
      $region17: #{tpu_custom_call.1} parent=5 // pred_check
        %p115 = pneg %p114
      $region18: #{tpu_custom_call.1} parent=5 // pred_check_branch
        %117 = sbr.rel (%p115) target = $region20
      $region19: #{tpu_custom_call.1} parent=5 // pred_region
        // Predicated region
        $region21: #{tpu_custom_call.1} parent=19 // pred_check
          %p118 = pneg %p35
        $region22: #{tpu_custom_call.1} parent=19 // pred_check_branch
          %120 = sbr.rel (%p118) target = $region24
        $region23: #{tpu_custom_call.1} parent=19 // pred_region
          %s121 = sand.u32 %s25, 1
          %s122 = scalar_lea.sflag [#allocation4], %s121
          %s123 = sand.u32 %s25, 1
          %s124 = smul.addr %s123, 6
          %s125 = scalar_lea.vmem [#allocation3], %s124
          %s127 = ssub.s32 96, 96
          %128 = vsyncadd %s122, %s127
          %s129 = smul.addr %s15, 3
          %s130 = smul.addr %s129, 32
          %s131 = scalar_lea.hbm %s0, %s130
          %s133 = sshll.u32 %s125, 4
          %s134 = int_to_ptr.vmem [resolvable:$true] %s133
          %136 = dma.hbm_to_vmem [thread:$0]  %s131, 96, %s134, %s122
        $region24: #{tpu_custom_call.1} parent=19 // pred_fallthru
          _
      $region20: #{tpu_custom_call.1} parent=5 // pred_fallthru
        _
      %p137 = scmp.le.s32.totalorder 1, %s15
      %p138 = scmp.lt.s32.totalorder %s15, 3
      %p139 = pnand %p137, %p138
      %p140 = pneg %p139
      // Predicated region
      $region25: #{tpu_custom_call.1} parent=5 // pred_check
        _
      $region26: #{tpu_custom_call.1} parent=5 // pred_check_branch
        %142 = sbr.rel (%p139) target = $region28
      $region27: #{tpu_custom_call.1} parent=5 // pred_region
        %s143 = ssub.s32 %s15, 1
        %s144 = sand.u32 %s28, 1
        %s145 = scalar_lea.sflag [#allocation4], %s144
        %s146 = sand.u32 %s28, 1
        %s147 = smul.addr %s146, 6
        %s148 = scalar_lea.vmem [#allocation3], %s147
        // Predicated region
        $region29: #{tpu_custom_call.1} parent=27 // pred_check
          %p149 = pneg %p41
        $region30: #{tpu_custom_call.1} parent=27 // pred_check_branch
          %151 = sbr.rel (%p149) target = $region32
        $region31: #{tpu_custom_call.1} parent=27 // pred_region
          %152 = dma.done %s145, 96
        $region32: #{tpu_custom_call.1} parent=27 // pred_fallthru
          _
        // Predicated region
        $region33: #{tpu_custom_call.1} parent=27 // pred_check
          %p153 = pneg %p62
        $region34: #{tpu_custom_call.1} parent=27 // pred_check_branch
          %155 = sbr.rel (%p153) target = $region36
        $region35: #{tpu_custom_call.1} parent=27 // pred_region
          %156 = dma.done [#allocation7], 64
        $region36: #{tpu_custom_call.1} parent=27 // pred_fallthru
          _
        %s157 = sand.u32 %s28, 1
        %s158 = scalar_lea.sflag [#allocation4], %s157
        %s159 = sand.u32 %s28, 1
        %s160 = smul.addr %s159, 6
        %s161 = scalar_lea.vmem [#allocation3], %s160
        %p162 = pneg %p41
        %p163 = pneg %p38
        %p164 = pneg %p62
        %p165 = pneg %p59
        %p166 = pneg %p88
        %p167 = pneg %p85
        %s168 = sand.u32 %s75, 1
        %s169 = scalar_lea.sflag [#allocation5], %s168
        %s170 = sand.u32 %s75, 1
        %s171 = smul.addr %s170, 24
        %s172 = scalar_lea.vmem [#allocation8], %s171
        %175 = vst [vmem:[#allocation2 + $0x30] sm:$0x44] 1065369472
        %176 = vst [vmem:[#allocation2 + $0x38] sm:$0x4] 1065369472
        %v177 = vld [vmem:[%s148] sm:$0x3f]
        %v179 = vcombine.high %v177, %v177
        %v181 = vunpack.c.l.s4 1983009808
        %v182 = vunpack.c.0.s8 %v181
        %v183 = vlaneseq
        %v184 = vshrl.u32 %v183, 7
        %v185 = vsub.s32 %v182, %v184
        %v186 = vrot.slane %v177, %v185
        %v188 = vunpack.c.l.s4 1983009808
        %v189 = vunpack.c.0.s8 %v188
        %v190 = vlaneseq
        %v191 = vshrl.u32 %v190, 7
        %v192 = vsub.s32 %v189, %v191
        %v193 = vrot.slane %v179, %v192
        %196 = vst [vmem:[#allocation2] sm:$0x33] %v186
        %vm197 = vcmask 254976
        %198 = vst.msk [vmem:[#allocation2 + $0x8] sm:$0x3] %vm197, %v193
        %v199 = vld [vmem:[%s148] sm:$0x3f]
        %v201 = vcombine.low %v199, %v199
        %v203 = vunpack.c.l.s4 1983009808
        %v204 = vunpack.c.0.s8 %v203
        %v205 = vlaneseq
        %v206 = vshrl.u32 %v205, 7
        %v207 = vsub.s32 %v204, %v206
        %v208 = vrot.slane %v201, %v207
        %v210 = vunpack.c.l.s4 1983009808
        %v211 = vunpack.c.0.s8 %v210
        %v212 = vlaneseq
        %v213 = vshrl.u32 %v212, 7
        %v214 = vsub.s32 %v211, %v213
        %v215 = vrot.slane %v199, %v214
        %216 = vrot.lane.b32.xlu0 %v208, 127
        %v217 = vpop.permute.xlu0 %216
        %218 = vrot.lane.b32.xlu0 %v215, 127
        %v219 = vpop.permute.xlu0 %218
        %v220 = vrot.slane %v217, 4
        %v221 = vrot.slane %v219, 4
        %vm222 = vcmask 1043456
        %v223 = vsel %vm222, %v220, %v221
        %vm224 = vcmask 1039360
        %v225 = vsel %vm224, %v217, %v223
        %228 = vst [vmem:[#allocation2] sm:$0xcc] %v225
        %vm229 = vcmask 257026
        %230 = vst.msk [vmem:[#allocation2 + $0x8] sm:$0xc] %vm229, %v219
        %v231 = vld [vmem:[%s148] sm:$0x3f]
        %v233 = vcombine.high %v231, %v231
        %v235 = vunpack.c.l.s4 1983009808
        %v236 = vunpack.c.0.s8 %v235
        %v237 = vlaneseq
        %v238 = vshrl.u32 %v237, 7
        %v239 = vsub.s32 %v236, %v238
        %v240 = vrot.slane %v231, %v239
        %v242 = vunpack.c.l.s4 1983009808
        %v243 = vunpack.c.0.s8 %v242
        %v244 = vlaneseq
        %v245 = vshrl.u32 %v244, 7
        %v246 = vsub.s32 %v243, %v245
        %v247 = vrot.slane %v233, %v246
        %248 = vrot.lane.b32.xlu0 %v240, 126
        %v249 = vpop.permute.xlu0 %248
        %250 = vrot.lane.b32.xlu0 %v247, 126
        %v251 = vpop.permute.xlu0 %250
        %v252 = vrot.slane %v249, 4
        %v253 = vrot.slane %v251, 4
        %v254 = vsel %vm222, %v252, %v253
        %vm255 = vcmask 1031168
        %v256 = vsel %vm255, %v249, %v254
        %259 = vst [vmem:[#allocation2 + $0xc] sm:$0x33] %v256
        %260 = vst.msk [vmem:[#allocation2 + $0x14] sm:$0x3] %vm197, %v251
        %v261 = vld [vmem:[%s148] sm:$0x3f]
        %v263 = vcombine.low %v261, %v261
        %v265 = vunpack.c.l.s4 1983009808
        %v266 = vunpack.c.0.s8 %v265
        %v267 = vlaneseq
        %v268 = vshrl.u32 %v267, 7
        %v269 = vsub.s32 %v266, %v268
        %v270 = vrot.slane %v263, %v269
        %v272 = vunpack.c.l.s4 1983009808
        %v273 = vunpack.c.0.s8 %v272
        %v274 = vlaneseq
        %v275 = vshrl.u32 %v274, 7
        %v276 = vsub.s32 %v273, %v275
        %v277 = vrot.slane %v261, %v276
        %278 = vrot.lane.b32.xlu0 %v270, 110
        %v279 = vpop.permute.xlu0 %278
        %280 = vrot.lane.b32.xlu0 %v277, 110
        %v281 = vpop.permute.xlu0 %280
        %v282 = vrot.slane %v279, 4
        %v283 = vrot.slane %v281, 4
        %v284 = vsel %vm222, %v282, %v283
        %vm285 = vcmask 900096
        %v286 = vsel %vm285, %v279, %v284
        %289 = vst [vmem:[#allocation2 + $0xc] sm:$0xcc] %v286
        %290 = vst.msk [vmem:[#allocation2 + $0x14] sm:$0xc] %vm229, %v281
        %v291 = vld [vmem:[%s148] sm:$0x3f]
        %v293 = vcombine.high %v291, %v291
        %v295 = vunpack.c.l.s4 1983009808
        %v296 = vunpack.c.0.s8 %v295
        %v297 = vlaneseq
        %v298 = vshrl.u32 %v297, 7
        %v299 = vsub.s32 %v296, %v298
        %v300 = vrot.slane %v291, %v299
        %v302 = vunpack.c.l.s4 1983009808
        %v303 = vunpack.c.0.s8 %v302
        %v304 = vlaneseq
        %v305 = vshrl.u32 %v304, 7
        %v306 = vsub.s32 %v303, %v305
        %v307 = vrot.slane %v293, %v306
        %308 = vrot.lane.b32.xlu0 %v300, 109
        %v309 = vpop.permute.xlu0 %308
        %310 = vrot.lane.b32.xlu0 %v307, 109
        %v311 = vpop.permute.xlu0 %310
        %v312 = vrot.slane %v309, 4
        %v313 = vrot.slane %v311, 4
        %v314 = vsel %vm222, %v312, %v313
        %vm315 = vcmask 891904
        %v316 = vsel %vm315, %v309, %v314
        %319 = vst [vmem:[#allocation2 + $0x18] sm:$0x33] %v316
        %320 = vst.msk [vmem:[#allocation2 + $0x20] sm:$0x3] %vm197, %v311
        %v321 = vld [vmem:[%s148] sm:$0x3f]
        %v323 = vcombine.low %v321, %v321
        %v325 = vunpack.c.l.s4 1983009808
        %v326 = vunpack.c.0.s8 %v325
        %v327 = vlaneseq
        %v328 = vshrl.u32 %v327, 7
        %v329 = vsub.s32 %v326, %v328
        %v330 = vrot.slane %v323, %v329
        %v332 = vunpack.c.l.s4 1983009808
        %v333 = vunpack.c.0.s8 %v332
        %v334 = vlaneseq
        %v335 = vshrl.u32 %v334, 7
        %v336 = vsub.s32 %v333, %v335
        %v337 = vrot.slane %v321, %v336
        %338 = vrot.lane.b32.xlu0 %v330, 108
        %v339 = vpop.permute.xlu0 %338
        %340 = vrot.lane.b32.xlu0 %v337, 108
        %v341 = vpop.permute.xlu0 %340
        %v342 = vrot.slane %v339, 4
        %v343 = vrot.slane %v341, 4
        %v344 = vsel %vm222, %v342, %v343
        %vm345 = vcmask 883712
        %v346 = vsel %vm345, %v339, %v344
        %349 = vst [vmem:[#allocation2 + $0x18] sm:$0xcc] %v346
        %350 = vst.msk [vmem:[#allocation2 + $0x20] sm:$0xc] %vm229, %v341
        %v351 = vld [vmem:[%s148] sm:$0x3f]
        %v353 = vcombine.high %v351, %v351
        %v355 = vunpack.c.l.s4 1983009808
        %v356 = vunpack.c.0.s8 %v355
        %v357 = vlaneseq
        %v358 = vshrl.u32 %v357, 7
        %v359 = vsub.s32 %v356, %v358
        %v360 = vrot.slane %v351, %v359
        %v362 = vunpack.c.l.s4 1983009808
        %v363 = vunpack.c.0.s8 %v362
        %v364 = vlaneseq
        %v365 = vshrl.u32 %v364, 7
        %v366 = vsub.s32 %v363, %v365
        %v367 = vrot.slane %v353, %v366
        %368 = vrot.lane.b32.xlu0 %v360, 92
        %v369 = vpop.permute.xlu0 %368
        %370 = vrot.lane.b32.xlu0 %v367, 92
        %v371 = vpop.permute.xlu0 %370
        %v372 = vrot.slane %v369, 4
        %v373 = vrot.slane %v371, 4
        %v374 = vsel %vm222, %v372, %v373
        %vm375 = vcmask 752640
        %v376 = vsel %vm375, %v369, %v374
        %379 = vst [vmem:[#allocation2 + $0x24] sm:$0x33] %v376
        %380 = vst.msk [vmem:[#allocation2 + $0x2c] sm:$0x3] %vm197, %v371
        %v381 = vld [vmem:[%s148] sm:$0x3f]
        %v383 = vcombine.low %v381, %v381
        %v385 = vunpack.c.l.s4 1983009808
        %v386 = vunpack.c.0.s8 %v385
        %v387 = vlaneseq
        %v388 = vshrl.u32 %v387, 7
        %v389 = vsub.s32 %v386, %v388
        %v390 = vrot.slane %v383, %v389
        %v392 = vunpack.c.l.s4 1983009808
        %v393 = vunpack.c.0.s8 %v392
        %v394 = vlaneseq
        %v395 = vshrl.u32 %v394, 7
        %v396 = vsub.s32 %v393, %v395
        %v397 = vrot.slane %v381, %v396
        %398 = vrot.lane.b32.xlu0 %v390, 91
        %v399 = vpop.permute.xlu0 %398
        %400 = vrot.lane.b32.xlu0 %v397, 91
        %v401 = vpop.permute.xlu0 %400
        %v402 = vrot.slane %v399, 4
        %v403 = vrot.slane %v401, 4
        %v404 = vsel %vm222, %v402, %v403
        %vm405 = vcmask 744448
        %v406 = vsel %vm405, %v399, %v404
        %409 = vst [vmem:[#allocation2 + $0x24] sm:$0xcc] %v406
        %410 = vst.msk [vmem:[#allocation2 + $0x2c] sm:$0xc] %vm229, %v401
        %v411 = vld [vmem:[%s148] sm:$0x3f]
        %v413 = vcombine.high %v411, %v411
        %v415 = vunpack.c.l.s4 1983009808
        %v416 = vunpack.c.0.s8 %v415
        %v417 = vlaneseq
        %v418 = vshrl.u32 %v417, 7
        %v419 = vsub.s32 %v416, %v418
        %v420 = vrot.slane %v411, %v419
        %v422 = vunpack.c.l.s4 1983009808
        %v423 = vunpack.c.0.s8 %v422
        %v424 = vlaneseq
        %v425 = vshrl.u32 %v424, 7
        %v426 = vsub.s32 %v423, %v425
        %v427 = vrot.slane %v413, %v426
        %428 = vrot.lane.b32.xlu0 %v420, 90
        %v429 = vpop.permute.xlu0 %428
        %430 = vrot.lane.b32.xlu0 %v427, 90
        %v431 = vpop.permute.xlu0 %430
        %v432 = vrot.slane %v429, 4
        %v433 = vrot.slane %v431, 4
        %v434 = vsel %vm222, %v432, %v433
        %vm435 = vcmask 736256
        %v436 = vsel %vm435, %v429, %v434
        %439 = vst [vmem:[#allocation2 + $0x30] sm:$0x33] %v436
        %440 = vst.msk [vmem:[#allocation2 + $0x38] sm:$0x3] %vm197, %v431
        %v441 = vld [vmem:[#allocation6] sm:$0xf]
        %v442 = vld [vmem:[#allocation2] sm:$0xff]
        %v443 = vld [vmem:[#allocation2 + $0x8] sm:$0xf]
        %v444 = vld [vmem:[#allocation2 + $0xc] sm:$0xff]
        %v445 = vld [vmem:[#allocation2 + $0x14] sm:$0xf]
        %v446 = vld [vmem:[#allocation2 + $0x18] sm:$0xff]
        %v447 = vld [vmem:[#allocation2 + $0x20] sm:$0xf]
        %v448 = vld [vmem:[#allocation2 + $0x24] sm:$0xff]
        %v449 = vld [vmem:[#allocation2 + $0x2c] sm:$0xf]
        %v450 = vld [vmem:[#allocation2 + $0x30] sm:$0x77]
        %v451 = vld [vmem:[#allocation2 + $0x38] sm:$0x7]
        %v462 = vunpack.c.l.b16 %v442
        %v463 = vunpack.c.h.b16 %v442
        %v464 = vunpack.c.l.b16 %v443
        %v465 = vunpack.c.l.b16 %v444
        %v466 = vunpack.c.h.b16 %v444
        %v467 = vunpack.c.l.b16 %v445
        %v468 = vunpack.c.l.b16 %v446
        %v469 = vunpack.c.h.b16 %v446
        %v470 = vunpack.c.l.b16 %v447
        %v471 = vunpack.c.l.b16 %v448
        %v472 = vunpack.c.h.b16 %v448
        %v473 = vunpack.c.l.b16 %v449
        %v474 = vunpack.c.l.b16 %v450
        %v475 = vunpack.c.h.b16 %v450
        %v476 = vunpack.c.l.b16 %v451
        %v477 = vpack.c.b16 %v465, %v462
        %v478 = vpack.c.b16 %v466, %v463
        %v479 = vpack.c.b16 %v467, %v464
        %v480 = vpack.c.b16 %v471, %v468
        %v481 = vpack.c.b16 %v472, %v469
        %v482 = vpack.c.b16 %v473, %v470
        %v483 = vpack.c.b16 %v474, %v474
        %v484 = vpack.c.b16 %v475, %v475
        %v485 = vpack.c.b16 %v476, %v476
        %vm492 = vcmask 310272
        %v494 = vsel %vm492, %v441, 0
        %vm496 = vcmask 1042432
        %v498 = vsel %vm496, %v483, 0
        %v501 = vsel %vm496, %v484, 0
        %v504 = vsel %vm496, %v485, 0
        %506 = vmatprep.subr.bf16.mxu0 %v478
        %507 = vmatpush1.bf16.msra.mxu0 %v477
        %508 = vmatprep.subr.bf16.mxu0 %v481
        %509 = vmatpush1.bf16.msra.mxu0 %v480
        %510 = vmatprep.subr.bf16.mxu0 %v501
        %511 = vmatpush1.bf16.msra.mxu0 %v498
        %512 = vmatprep.subr.bf16.mxu0 0
        %513 = vmatpush1.bf16.msra.mxu0 0
        %514 = vmatprep.subr.bf16.mxu0 0
        %515 = vmatpush1.bf16.msra.mxu0 0
        %516 = vmatprep.subr.bf16.mxu0 0
        %517 = vmatpush1.bf16.msra.mxu0 0
        %518 = vmatprep.subr.bf16.mxu0 0
        %519 = vmatpush1.bf16.msra.mxu0 0
        %520 = vmatprep.subr.bf16.mxu0 0
        %521 = vmatpush1.bf16.msra.mxu0 0
        %522 = vmatprep.subr.bf16.mxu0 0
        %523 = vmatpush1.bf16.msra.mxu0 0
        %524 = vmatprep.subr.bf16.mxu0 0
        %525 = vmatpush1.bf16.msra.mxu0 0
        %526 = vmatprep.subr.bf16.mxu0 0
        %527 = vmatpush1.bf16.msra.mxu0 0
        %528 = vmatprep.subr.bf16.mxu0 0
        %529 = vmatpush1.bf16.msra.mxu0 0
        %530 = vmatprep.subr.bf16.mxu0 0
        %531 = vmatpush1.bf16.msra.mxu0 0
        %532 = vmatprep.subr.bf16.mxu0 0
        %533 = vmatpush1.bf16.msra.mxu0 0
        %534 = vmatprep.subr.bf16.mxu0 0
        %535 = vmatpush1.bf16.msra.mxu0 0
        %536 = vmatprep.subr.bf16.mxu0 0
        %537 = vmatpush1.bf16.msra.mxu0 0
        %538 = vmatprep.mubr.bf16.mxu0 0
        %539 = vmatmul.mubr.bf16.gmra.mrb[0].mxu0 %v494
        %v540 = vpop.f32.mrb[0].mxu0
        %v541 = vadd.f32 0.0, %v540
        %v542 = vpop.f32.mrb[0].mxu0
        %v543 = vadd.f32 0.0, %v542
        %v544 = vpop.f32.mrb[0].mxu0
        %v545 = vpop.f32.mrb[0].mxu0
        %546 = vdwg.mxu0
        %547 = vmatprep.subr.bf16.mxu0 0
        %548 = vmatpush1.bf16.msra.mxu0 %v479
        %549 = vmatprep.subr.bf16.mxu0 0
        %550 = vmatpush1.bf16.msra.mxu0 %v482
        %551 = vmatprep.subr.bf16.mxu0 0
        %552 = vmatpush1.bf16.msra.mxu0 %v504
        %553 = vmatprep.subr.bf16.mxu0 0
        %554 = vmatpush1.bf16.msra.mxu0 0
        %555 = vmatprep.subr.bf16.mxu0 0
        %556 = vmatpush1.bf16.msra.mxu0 0
        %557 = vmatprep.subr.bf16.mxu0 0
        %558 = vmatpush1.bf16.msra.mxu0 0
        %559 = vmatprep.subr.bf16.mxu0 0
        %560 = vmatpush1.bf16.msra.mxu0 0
        %561 = vmatprep.subr.bf16.mxu0 0
        %562 = vmatpush1.bf16.msra.mxu0 0
        %563 = vmatprep.subr.bf16.mxu0 0
        %564 = vmatpush1.bf16.msra.mxu0 0
        %565 = vmatprep.subr.bf16.mxu0 0
        %566 = vmatpush1.bf16.msra.mxu0 0
        %567 = vmatprep.subr.bf16.mxu0 0
        %568 = vmatpush1.bf16.msra.mxu0 0
        %569 = vmatprep.subr.bf16.mxu0 0
        %570 = vmatpush1.bf16.msra.mxu0 0
        %571 = vmatprep.subr.bf16.mxu0 0
        %572 = vmatpush1.bf16.msra.mxu0 0
        %573 = vmatprep.subr.bf16.mxu0 0
        %574 = vmatpush1.bf16.msra.mxu0 0
        %575 = vmatprep.subr.bf16.mxu0 0
        %576 = vmatpush1.bf16.msra.mxu0 0
        %577 = vmatprep.subr.bf16.mxu0 0
        %578 = vmatpush1.bf16.msra.mxu0 0
        %579 = vmatprep.mubr.bf16.mxu0 0
        %580 = vmatmul.mubr.bf16.gmra.mrb[0].mxu0 %v494
        %v581 = vpop.f32.mrb[0].mxu0
        %v582 = vadd.f32 0.0, %v581
        %v583 = vpop.f32.mrb[0].mxu0
        %v584 = vpop.f32.mrb[0].mxu0
        %v585 = vpop.f32.mrb[0].mxu0
        %586 = vdwg.mxu0
        %587 = vst [vmem:[%s172] sm:$0xff] %v541
        %588 = vst [vmem:[%s172 + $0x8] sm:$0xff] %v543
        %vm589 = vcmask 261120
        %590 = vst.msk [vmem:[%s172 + $0x10] sm:$0xff] %vm589, %v582
        %s591 = sand.u32 %s75, 1
        %s592 = scalar_lea.sflag [#allocation5], %s591
        %s593 = sand.u32 %s75, 1
        %s594 = smul.addr %s593, 24
        %s595 = scalar_lea.vmem [#allocation8], %s594
        // Predicated region
        $region37: #{tpu_custom_call.1} parent=27 // pred_check
          %p596 = pneg %p85
        $region38: #{tpu_custom_call.1} parent=27 // pred_check_branch
          %598 = sbr.rel (%p596) target = $region40
        $region39: #{tpu_custom_call.1} parent=27 // pred_region
          %s600 = ssub.s32 384, 384
          %601 = vsyncadd %s592, %s600
          %s602 = smul.addr %s20, 3
          %s603 = smul.addr %s602, 128
          %s604 = scalar_lea.hbm %s2, %s603
          %s606 = sshll.u32 %s595, 4
          %s607 = int_to_ptr.vmem [resolvable:$true] %s606
          %609 = dma.vmem_to_hbm [thread:$0]  %s607, 384, %s604, %s592
        $region40: #{tpu_custom_call.1} parent=27 // pred_fallthru
          _
      $region28: #{tpu_custom_call.1} parent=5 // pred_fallthru
        _
      %p610 = scmp.le.s32.totalorder 2, %s15
      // Predicated region
      $region41: #{tpu_custom_call.1} parent=5 // pred_check
        %p611 = pneg %p610
      $region42: #{tpu_custom_call.1} parent=5 // pred_check_branch
        %613 = sbr.rel (%p611) target = $region44
      $region43: #{tpu_custom_call.1} parent=5 // pred_region
        %s614 = ssub.s32 %s15, 2
        // Predicated region
        $region45: #{tpu_custom_call.1} parent=43 // pred_check
          %p615 = pneg %p91
        $region46: #{tpu_custom_call.1} parent=43 // pred_check_branch
          %617 = sbr.rel (%p615) target = $region48
        $region47: #{tpu_custom_call.1} parent=43 // pred_region
          %s618 = sand.u32 %s76, 1
          %s619 = scalar_lea.sflag [#allocation5], %s618
          %s620 = sand.u32 %s76, 1
          %s621 = smul.addr %s620, 24
          %s622 = scalar_lea.vmem [#allocation8], %s621
          %623 = dma.done %s619, 384
        $region48: #{tpu_custom_call.1} parent=43 // pred_fallthru
          _
      $region44: #{tpu_custom_call.1} parent=5 // pred_fallthru
        _
    $region6: #{tpu_custom_call.1} parent=1 // loop_footer
      %s19 = sadd.s32 1, %s15
    $region7: #{tpu_custom_call.1} parent=1 // loop_footer_branch
      %14 = sbr.rel target = $region3
    $region8: #{tpu_custom_call.1} parent=1 // loop_exit
      _
    %624 = vsyncpa [#allocation4], 1
    %s625 = scalar_lea.sflag [#allocation4], 1
    %626 = vsyncpa %s625, 1
    %627 = vsyncpa [#allocation7], 1
    %628 = vsyncpa [#allocation5], 1
    %s629 = scalar_lea.sflag [#allocation5], 1
    %630 = vsyncpa %s629, 1

</llo_original>
